<compile_context>
chip_gen: v7x
topology: tpu7x:2x2x1
jax: 0.10.0
libtpu: 0.0.40
codegen_flags: <defaults>
</compile_context>

<pallas_src>
import functools

import jax
import jax.numpy as jnp
from jax.experimental import pallas as pl
from jax.experimental.pallas import tpu as pltpu


def _round_up(x, m):
    return ((x + m - 1) // m) * m


# ---------------------------------------------------------------------------
# Kernel
# ---------------------------------------------------------------------------
def _rope_kernel(*refs, scaling, half, d, ts, path, contiguous, start):
    """Writes one (ts, d) row-block of the cos / sin tables.

    refs:
      [pos_ref]  (ts, 1) f32   -- only when contiguous=False
      inv_ref    (1, half) f32 for path=="split_wide", else (1, d) f32 (dup'd)
      cos_ref    (ts, d) out
      sin_ref    (ts, d) out
    """
    if contiguous:
        inv_ref, cos_ref, sin_ref = refs
        pos_ref = None
    else:
        pos_ref, inv_ref, cos_ref, sin_ref = refs

    def positions(nrows, row_off):
        # (nrows, 1) f32 positions for block rows [row_off, row_off + nrows)
        if contiguous:
            base = start + pl.program_id(0) * ts + row_off
            rows = jax.lax.broadcasted_iota(jnp.int32, (nrows, 1), 0)
            return (rows + base).astype(jnp.float32)
        return pos_ref[row_off:row_off + nrows, :]

    def cos_sin(freqs):
        c = jnp.cos(freqs)
        s = jnp.sin(freqs)
        if scaling != 1.0:
            c = c * scaling
            s = s * scaling
        return c, s

    inv = inv_ref[...]                                   # (1, half) or (1, d)

    if path == "split_wide":
        # half >= 128 and half % 128 == 0: genuine EUP halving — compute on
        # (ts, half) full-lane vregs, store the same tile into both halves.
        c, s = cos_sin(positions(ts, 0) * inv)           # VPU outer product
        c = c.astype(cos_ref.dtype)
        s = s.astype(sin_ref.dtype)
        cos_ref[:, :half] = c
        cos_ref[:, half:] = c
        sin_ref[:, :half] = s
        sin_ref[:, half:] = s

    elif path == "split128":
        # d == 128 (half == 64): pack two positions per 128-lane row so every
        # EUP vreg is fully useful, then rebuild the duplicated-halves layout
        # with a lane roll + selects (XLU/VPU have slack; EUP is binding).
        hr = ts // 2
        lane = jax.lax.broadcasted_iota(jnp.int32, (hr, d), 1)
        lo = lane < half
        pos_w = jnp.where(lo, positions(hr, 0), positions(hr, hr))   # (hr, d)
        c, s = cos_sin(pos_w * inv)                                  # inv = [f|f]
        c_r = pltpu.roll(c, half, 1)
        s_r = pltpu.roll(s, half, 1)
        cos_ref[:hr, :] = jnp.where(lo, c, c_r).astype(cos_ref.dtype)
        cos_ref[hr:, :] = jnp.where(lo, c_r, c).astype(cos_ref.dtype)
        sin_ref[:hr, :] = jnp.where(lo, s, s_r).astype(sin_ref.dtype)
        sin_ref[hr:, :] = jnp.where(lo, s_r, s).astype(sin_ref.dtype)

    else:  # "dense": any head_dim (including < 128), duplicated inv_freq.
        c, s = cos_sin(positions(ts, 0) * inv)
        cos_ref[...] = c.astype(cos_ref.dtype)
        sin_ref[...] = s.astype(sin_ref.dtype)


# ---------------------------------------------------------------------------
# Tiling
# ---------------------------------------------------------------------------
def _choose_tile(S, d, out_itemsize, tile_rows, contiguous):
    """Pick rows-per-grid-step.  Returns (ts, num_blocks)."""
    if S <= 1024:
        # Single block covering all rows: block dims == full array dims, so the
        # (8,128) rule is satisfied for any S, and there is nothing to slice.
        return S, 1

    # VMEM budget per grid step (double-buffered by the pipeline):
    #   cos/sin outputs + lane-padded (ts,1) pos block + f32 temp margin.
    bytes_per_row = (4 * d * out_itemsize
                     + (0 if contiguous else 2 * 128 * 4)
                     + 16 * d)
    budget = 24 * 1024 * 1024                     # headroom under the 32 MiB limit
    cap = max(8, (budget // bytes_per_row) // 8 * 8)

    ts = min(_round_up(max(int(tile_rows), 8), 8), cap)
    ts = max(ts, min(512, cap))                   # floor ~512 rows (review #2)
    # Megacore: make sure both v7x TensorCores get at least one step (review #6).
    ts = min(ts, _round_up(pl.cdiv(S, 2), 8))
    return ts, pl.cdiv(S, ts)


# ---------------------------------------------------------------------------
# Wrapper
# ---------------------------------------------------------------------------
def hf_rotary_embedding(x, position_ids, inv_freq, attention_scaling=1.0,
                        tile_rows=4096, contiguous_positions=False,
                        start_position=0):
    """Pallas implementation of HuggingFaceRotaryEmbedding.forward.

    x:            any array; only its dtype is used (like the torch module).
    position_ids: (S,) integer positions.
    inv_freq:     (D/2,) float inverse frequencies, D = head_dim.
    contiguous_positions: if True, positions are assumed to be
        start_position + arange(S); they are synthesized in-kernel and the
        (S,1) position DMA is skipped (fast prefill path).
    Returns (cos, sin), each (1, S, D), dtype x.dtype.  No padding / no
    post-kernel copies: the kernel writes the (S, D) tables directly.
    """
    position_ids = position_ids.reshape(-1)
    S = int(position_ids.shape[0])
    half = int(inv_freq.shape[0])
    d = 2 * half
    out_dtype = x.dtype
    scaling = float(attention_scaling)
    contiguous = bool(contiguous_positions)

    ts, num_blocks = _choose_tile(S, d, jnp.dtype(out_dtype).itemsize,
                                  tile_rows, contiguous)

    inv_f32 = inv_freq.astype(jnp.float32)
    if half >= 128 and half % 128 == 0:
        path = "split_wide"
        inv_in = inv_f32.reshape(1, half)
    else:
        path = "split128" if (d == 128 and ts % 16 == 0) else "dense"
        inv_in = jnp.concatenate([inv_f32, inv_f32]).reshape(1, d)  # once, in XLA

    kernel = functools.partial(
        _rope_kernel, scaling=scaling, half=half, d=d, ts=ts,
        path=path, contiguous=contiguous, start=int(start_position))

    in_specs = []
    operands = []
    if not contiguous:
        pos2d = position_ids.astype(jnp.float32).reshape(S, 1)
        in_specs.append(pl.BlockSpec((ts, 1), lambda i: (i, 0)))
        operands.append(pos2d)
    inv_cols = inv_in.shape[1]
    in_specs.append(pl.BlockSpec((1, inv_cols), lambda i: (0, 0)))
    operands.append(inv_in)

    out_block = pl.BlockSpec((ts, d), lambda i: (i, 0))
    cos2d, sin2d = pl.pallas_call(
        kernel,
        grid=(num_blocks,),
        out_shape=(jax.ShapeDtypeStruct((S, d), out_dtype),
                   jax.ShapeDtypeStruct((S, d), out_dtype)),
        in_specs=in_specs,
        out_specs=(out_block, out_block),
        compiler_params=pltpu.CompilerParams(
            dimension_semantics=("parallel",),
            vmem_limit_bytes=32 * 1024 * 1024),
    )(*operands)

    # Leading unsqueeze(0) batch axis only — free reshape, no relayout/slice.
    return cos2d[None], sin2d[None]


# ---------------------------------------------------------------------------
# Helpers / reference
# ---------------------------------------------------------------------------
def make_inv_freq(dim, n_heads, rope_theta):
    head_dim = dim // n_heads
    exponent = jnp.arange(0, head_dim, 2, dtype=jnp.float32) / head_dim
    return 1.0 / (rope_theta ** exponent)                   # (head_dim // 2,)


def reference(x, position_ids, inv_freq, attention_scaling=1.0):
    # Rank-1 "matmul" written as an fp32 outer product (matches the torch fp32
    # path; avoids TPU default-precision matmul lowering in the reference).
    pos = position_ids.astype(jnp.float32)[None, :, None]            # (1, S, 1)
    inv = inv_freq.astype(jnp.float32)[None, None, :]                # (1, 1, D/2)
    freqs = pos * inv                                                # (1, S, D/2)
    emb = jnp.concatenate([freqs, freqs], axis=-1)                   # (1, S, D)
    cos = jnp.cos(emb) * attention_scaling
    sin = jnp.sin(emb) * attention_scaling
    return cos.astype(x.dtype), sin.astype(x.dtype)


if __name__ == "__main__":
    key = jax.random.PRNGKey(0)
    rope_theta = 500000.0
    batch = 2

    cases = [
        #  name                  dim   heads  seq   dtype          scaling  contig
        ("split128_general",     512,  4,     32,   jnp.float32,   1.0,     False),
        ("dense128_contig",      512,  4,     200,  jnp.float32,   1.0,     True),
        ("dense64_multiblock",   256,  4,     1100, jnp.float32,   1.0,     False),
        ("splitwide_d256",       1024, 4,     16,   jnp.float32,   1.0,     False),
        ("split128_bf16_scaled", 512,  4,     48,   jnp.bfloat16,  0.5,     True),
    ]

    for idx, (name, dim, n_heads, seq, dtype, scaling, contig) in enumerate(cases):
        head_dim = dim // n_heads
        kx = jax.random.fold_in(key, idx)
        x = jax.random.normal(kx, (batch, seq, dim)).astype(dtype)

        if name == "split128_general":
            position_ids = jnp.arange(seq, dtype=jnp.int32) * 7 + 3
        elif name == "dense64_multiblock":
            position_ids = (jnp.arange(seq, dtype=jnp.int32) * 13) % 251
        elif name == "splitwide_d256":
            position_ids = jax.random.randint(jax.random.fold_in(kx, 1), (seq,),
                                              0, 300, dtype=jnp.int32)
        else:  # contiguous prefill cases
            position_ids = jnp.arange(seq, dtype=jnp.int32)

        inv_freq = make_inv_freq(dim, n_heads, rope_theta)

        cos, sin = hf_rotary_embedding(x, position_ids, inv_freq,
                                       attention_scaling=scaling,
                                       contiguous_positions=contig)
        cos = jax.block_until_ready(cos)
        sin = jax.block_until_ready(sin)

        cos_ref, sin_ref = reference(x, position_ids, inv_freq,
                                     attention_scaling=scaling)

        assert cos.shape == (1, seq, head_dim), (name, cos.shape)
        assert sin.shape == (1, seq, head_dim), (name, sin.shape)
        assert cos.dtype == x.dtype and sin.dtype == x.dtype, name

        tol = 2e-2 if dtype == jnp.bfloat16 else 1e-3
        assert jnp.allclose(cos.astype(jnp.float32), cos_ref.astype(jnp.float32),
                            atol=tol), name
        assert jnp.allclose(sin.astype(jnp.float32), sin_ref.astype(jnp.float32),
                            atol=tol), name

    print("KERNEL_OK")
</pallas_src>

<mosaic_0001>
module attributes {stable_mosaic.version = 11 : i64} {
  func.func @_rope_kernel(%arg0: i32, %arg1: memref<32x1xf32, #tpu.memory_space<vmem>>, %arg2: memref<1x128xf32, #tpu.memory_space<vmem>>, %arg3: memref<32x128xf32, #tpu.memory_space<vmem>>, %arg4: memref<32x128xf32, #tpu.memory_space<vmem>>) attributes {dimension_semantics = [#tpu.dimension_semantics<parallel>], iteration_bounds = array<i64: 1>, scalar_prefetch = 0 : i64, scratch_operands = 0 : i64, tpu.core_type = #tpu.core_type<tc>, window_params = [{transform_indices = @transform_0, window_bounds = array<i64: 32, 1>}, {pipeline_mode = #tpu.pipeline_mode<synchronous>, transform_indices = @transform_1, window_bounds = array<i64: 1, 128>}, {transform_indices = @transform_2, window_bounds = array<i64: 32, 128>}, {transform_indices = @transform_3, window_bounds = array<i64: 32, 128>}]} {
    %c0 = arith.constant 0 : index
    %c0_0 = arith.constant 0 : index
    %0 = vector.load %arg2[%c0, %c0_0] : memref<1x128xf32, #tpu.memory_space<vmem>>, vector<1x128xf32>
    %1 = tpu.iota {dimensions = array<i32: 1>} : vector<16x128xi32>
    %c64_i32 = arith.constant 64 : i32
    %2 = vector.broadcast %c64_i32 : i32 to vector<16x128xi32>
    %3 = arith.cmpi slt, %1, %2 : vector<16x128xi32>
    %c0_1 = arith.constant 0 : index
    %c0_2 = arith.constant 0 : index
    %4 = vector.load %arg1[%c0_1, %c0_2] : memref<32x1xf32, #tpu.memory_space<vmem>>, vector<16x1xf32>
    %c16 = arith.constant 16 : index
    %c0_3 = arith.constant 0 : index
    %5 = vector.load %arg1[%c16, %c0_3] : memref<32x1xf32, #tpu.memory_space<vmem>>, vector<16x1xf32>
    %6 = vector.shape_cast %4 : vector<16x1xf32> to vector<16x1xf32>
    %7 = vector.broadcast %6 : vector<16x1xf32> to vector<16x128xf32>
    %8 = vector.shape_cast %5 : vector<16x1xf32> to vector<16x1xf32>
    %9 = vector.broadcast %8 : vector<16x1xf32> to vector<16x128xf32>
    %10 = arith.select %3, %7, %9 : vector<16x128xi1>, vector<16x128xf32>
    %11 = vector.broadcast %0 : vector<1x128xf32> to vector<16x128xf32>
    %12 = arith.mulf %10, %11 : vector<16x128xf32>
    %13 = math.cos %12 : vector<16x128xf32>
    %14 = math.sin %12 : vector<16x128xf32>
    %c64_i32_4 = arith.constant 64 : i32
    %15 = tpu.dynamic_rotate %13 by %c64_i32_4 dim 1 : vector<16x128xf32>, i32 -> vector<16x128xf32>
    %c64_i32_5 = arith.constant 64 : i32
    %16 = tpu.dynamic_rotate %14 by %c64_i32_5 dim 1 : vector<16x128xf32>, i32 -> vector<16x128xf32>
    %17 = arith.select %3, %13, %15 : vector<16x128xi1>, vector<16x128xf32>
    %c0_6 = arith.constant 0 : index
    %c0_7 = arith.constant 0 : index
    %18 = vector.load %arg3[%c0_6, %c0_7] : memref<32x128xf32, #tpu.memory_space<vmem>>, vector<16x128xf32>
    tpu.vector_store %arg3[%c0_6, %c0_7], %17 {strides = array<i32>} : memref<32x128xf32, #tpu.memory_space<vmem>>, vector<16x128xf32>,
    %19 = arith.select %3, %15, %13 : vector<16x128xi1>, vector<16x128xf32>
    %c16_8 = arith.constant 16 : index
    %c0_9 = arith.constant 0 : index
    %20 = vector.load %arg3[%c16_8, %c0_9] : memref<32x128xf32, #tpu.memory_space<vmem>>, vector<16x128xf32>
    tpu.vector_store %arg3[%c16_8, %c0_9], %19 {strides = array<i32>} : memref<32x128xf32, #tpu.memory_space<vmem>>, vector<16x128xf32>,
    %21 = arith.select %3, %14, %16 : vector<16x128xi1>, vector<16x128xf32>
    %c0_10 = arith.constant 0 : index
    %c0_11 = arith.constant 0 : index
    %22 = vector.load %arg4[%c0_10, %c0_11] : memref<32x128xf32, #tpu.memory_space<vmem>>, vector<16x128xf32>
    tpu.vector_store %arg4[%c0_10, %c0_11], %21 {strides = array<i32>} : memref<32x128xf32, #tpu.memory_space<vmem>>, vector<16x128xf32>,
    %23 = arith.select %3, %16, %14 : vector<16x128xi1>, vector<16x128xf32>
    %c16_12 = arith.constant 16 : index
    %c0_13 = arith.constant 0 : index
    %24 = vector.load %arg4[%c16_12, %c0_13] : memref<32x128xf32, #tpu.memory_space<vmem>>, vector<16x128xf32>
    tpu.vector_store %arg4[%c16_12, %c0_13], %23 {strides = array<i32>} : memref<32x128xf32, #tpu.memory_space<vmem>>, vector<16x128xf32>,
    return
  }
  func.func @transform_0(%arg0: i32) -> (i32, i32) {
    %c0_i32 = arith.constant 0 : i32
    %c0_i32_0 = arith.constant 0 : i32
    return %arg0, %c0_i32 : i32, i32
  }
  func.func @transform_1(%arg0: i32) -> (i32, i32) {
    %c0_i32 = arith.constant 0 : i32
    %c0_i32_0 = arith.constant 0 : i32
    %c0_i32_1 = arith.constant 0 : i32
    return %c0_i32, %c0_i32_0 : i32, i32
  }
  func.func @transform_2(%arg0: i32) -> (i32, i32) {
    %c0_i32 = arith.constant 0 : i32
    %c0_i32_0 = arith.constant 0 : i32
    return %arg0, %c0_i32 : i32, i32
  }
  func.func @transform_3(%arg0: i32) -> (i32, i32) {
    %c0_i32 = arith.constant 0 : i32
    %c0_i32_0 = arith.constant 0 : i32
    return %arg0, %c0_i32 : i32, i32
  }
}

</mosaic_0001>

<llo_original>
// kernel: tpu_custom_call.1
$region0: #{tpu_custom_call.1}
  #allocation0 [shape = 'u32[]', space=smem, size = 0x4, offset = 0x4, fixed_abs, tag = 'smem constant byte address 0x4 - core index']
  #allocation1 [shape = 'u32[144,128]{1,0:T(1,128)}', space=vmem, size = 0x12000, scoped, tag = 'internal scratch']
  %s0 = inlined_call_operand.vmem [shape: f32[32,1], index: 0, kind: input, shape index: {}]
  %s1 = inlined_call_operand.vmem [shape: f32[1,128], index: 1, kind: input, shape index: {}]
  %s2 = inlined_call_operand.hbm [shape: f32[32,128], index: 2, kind: output, shape index: {0}]
  %s3 = inlined_call_operand.hbm [shape: f32[32,128], index: 3, kind: output, shape index: {1}]
  %4 = xla_tuple %s2, %s3
  %s5 = sld [smem:[#allocation0]]
  $region26: #{tpu_custom_call.1} parent=0
    _
  %s7 = ssub.s32 1, %s5
  %s8 = scalar_select 0, %s7, %s5
  $region1: #{tpu_custom_call.1} parent=0
    #allocation2 [shape = 'u8[16384]{0}', space=vmem, size = 0x4000, scoped, tag = 'output window, operand 0, single buffered']
    #allocation3 [shape = 's32[1]{0}', space=sflag, size = 0x4, scoped, tag = 'scoped memory for tpu_custom_call.1']
    #allocation4 [shape = 'u8[16384]{0}', space=vmem, size = 0x4000, scoped, tag = 'output window, operand 1, single buffered']
    #allocation5 [shape = 's32[1]{0}', space=sflag, size = 0x4, scoped, tag = 'scoped memory for tpu_custom_call.1']
    %9 = vsyncpa [#allocation3], 0
    %10 = vsyncpa [#allocation5], 0
    // Predicated region
    $region2: #{tpu_custom_call.1} parent=1 // pred_check
      _
    $region3: #{tpu_custom_call.1} parent=1 // pred_check_branch
      %12 = sbr.rel (0) target = $region5
    $region4: #{tpu_custom_call.1} parent=1 // pred_region
      _
    $region5: #{tpu_custom_call.1} parent=1 // pred_fallthru
      _
    // Predicated region
    $region6: #{tpu_custom_call.1} parent=1 // pred_check
      _
    $region7: #{tpu_custom_call.1} parent=1 // pred_check_branch
      %14 = sbr.rel (0) target = $region9
    $region8: #{tpu_custom_call.1} parent=1 // pred_region
      _
    $region9: #{tpu_custom_call.1} parent=1 // pred_fallthru
      _
    %v15 = vld [vmem:[%s1] sm:$0x1]
    %v16 = vlaneseq
    %v17 = vand.u32 %v16, 127
    %vm18 = vcmp.lt.s32.totalorder %v17, 64
    %v19 = vld [vmem:[%s0] sm:$0xff]
    %v20 = vld [vmem:[%s0 + $0x8] sm:$0xff]
    %v21 = vld [vmem:[%s0 + $0x10] sm:$0xff]
    %v22 = vld [vmem:[%s0 + $0x18] sm:$0xff]
    %24 = vset.pattern.permute.xlu0 0
    %25 = vperm.xlu0 %24, %v19
    %v26 = vpop.permute.xlu0 %25
    %29 = vset.pattern.permute.xlu0 0
    %30 = vperm.xlu0 %29, %v20
    %v31 = vpop.permute.xlu0 %30
    %34 = vset.pattern.permute.xlu0 0
    %35 = vperm.xlu0 %34, %v21
    %v36 = vpop.permute.xlu0 %35
    %39 = vset.pattern.permute.xlu0 0
    %40 = vperm.xlu0 %39, %v22
    %v41 = vpop.permute.xlu0 %40
    %v43 = vsel %vm18, %v26, %v36
    %v44 = vsel %vm18, %v31, %v41
    %v46 = vlaneseq
    %v47 = vshrl.u32 %v46, 7
    %v48 = vsub.s32 0, %v47
    %v49 = vrot.slane %v15, %v48
    %v51 = vmul.f32 %v43, %v49
    %v52 = vmul.f32 %v44, %v49
    %v53 = vand.u32 2147483647, %v51
    %vm54 = vcmp.le.f32.partialorder %v53, 0.7853982
    %vm55 = vcmp.lt.s32.totalorder %v51, 0
    %v56 = vand.u32 %v51, 2139095040
    %v57 = vshrl.u32 %v56, 23
    %v58 = vsub.s32 %v57, 127
    %v59 = vand.u32 2147483647, %v51
    %v60 = vand.u32 %v59, 8388607
    %v61 = vor.u32 %v60, 8388608
    %v62 = vsub.s32 0, %v61
    %v63 = vadd.s32 %v58, 1
    %vm64 = vcmp.gt.s32.totalorder %v63, 0
    %v65 = vsel %vm64, %v63, 0
    %v66 = vshrl.u32 %v65, 5
    %v67 = vand.u32 %v65, 31
    %v68 = vsub.s32 32, %v67
    %v69 = vshrl.u32 683565275, %v68
    %v70 = vshll.u32 683565275, %v67
    %v71 = vshrl.u32 2475754826, %v68
    %v72 = vor.u32 %v70, %v71
    %v73 = vshll.u32 2475754826, %v67
    %v74 = vshrl.u32 2131351028, %v68
    %v75 = vor.u32 %v73, %v74
    %v76 = vshll.u32 2131351028, %v67
    %v77 = vshrl.u32 2102212464, %v68
    %v78 = vor.u32 %v76, %v77
    %v79 = vshll.u32 2102212464, %v67
    %v80 = vshrl.u32 920167782, %v68
    %v81 = vor.u32 %v79, %v80
    %v82 = vshll.u32 920167782, %v67
    %v83 = vshrl.u32 1326507024, %v68
    %v84 = vor.u32 %v82, %v83
    %vm85 = vcmp.lt.s32.totalorder %v66, 1
    %vm86 = vcmp.lt.s32.totalorder %v66, 2
    %vm87 = vcmp.lt.s32.totalorder %v66, 3
    %vm88 = vcmp.lt.s32.totalorder %v66, 4
    %v89 = vsel %vm85, %v69, %v72
    %v90 = vsel %vm88, %v78, 2102212464
    %v91 = vsel %vm87, %v75, %v90
    %v92 = vsel %vm86, %v89, %v91
    %v93 = vsel %vm85, %v72, %v75
    %v94 = vsel %vm88, %v81, 920167782
    %v95 = vsel %vm87, %v78, %v94
    %v96 = vsel %vm86, %v93, %v95
    %v97 = vsel %vm85, %v75, %v78
    %v98 = vsel %vm88, %v84, 1326507024
    %v99 = vsel %vm87, %v81, %v98
    %v100 = vsel %vm86, %v97, %v99
    %v101 = vshll.u32 %v61, 8
    %v102 = vmul.u32.u64.compose %v101, %v100
    %v103 = vextract.low.u32 %v102
    %v104 = vextract.high.u32 %v102
    %v105 = vmul.u32.u64.compose %v101, %v96
    %v106 = vextract.low.u32 %v105
    %v107 = vextract.high.u32 %v105
    %v108 = vmul.u32 %v101, %v92
    %v109 = vadd.s32 %v104, %v106
    %vm110 = vc.u32 %v104, %v106
    %v111 = vadd.s32 %v107, 1
    %v112 = vsel %vm110, %v111, %v107
    %v113 = vadd.s32 %v108, %v112
    %v114 = vadd.s32 %v113, 536870912
    %v115 = vshrl.u32 %v114, 30
    %v116 = vshll.u32 %v115, 30
    %v117 = vsub.s32 %v113, %v116
    %vm118 = vcmp.lt.s32.totalorder %v117, 0
    %v119 = vsub.s32 0, %v117
    %v120 = vsel %vm118, %v119, %v117
    %v121 = vclz %v120
    %v122 = vsub.s32 %v121, 2
    %vm123 = vcmp.gt.s32.totalorder 0, %v122
    %v124 = vsel %vm123, 0, %v122
    %v125 = vsub.s32 32, %v124
    %v126 = vshll.u32 %v117, %v124
    %v127 = vshrl.u32 %v109, %v125
    %v128 = vor.u32 %v126, %v127
    %v129 = vsub.s32 4294967266, %v124
    %v130 = vadd.s32 %v129, 127
    %v131 = vshll.u32 %v130, 23
    %v132 = vor.u32 4788187, %v131
    %v133 = vand.u32 2147483647, %v132
    %v135 = vcvt.s32.f32 %v128
    %v136 = vmul.f32 %v135, %v133
    %v137 = vxor.u32 %v136, 2147483648
    %v138 = vsel %vm55, %v137, %v136
    %v139 = vsub.s32 4, %v115
    %v140 = vsel %vm55, %v139, %v115
    %v141 = vsel %vm54, %v51, %v138
    %v142 = vsel %vm54, 0, %v140
    %v143 = vcosq.f32.pop %v141
    %v144 = vsinq.f32.pop %v141
    %vm145 = vweird.f32 %v51
    %v146 = vand.u32 %v142, 3
    %vm147 = vcmp.lt.s32.totalorder %v146, 2
    %vm148 = vcmp.eq.s32.totalorder %v146, 0
    %v149 = vxor.u32 %v144, 2147483648
    %v150 = vsel %vm148, %v143, %v149
    %vm151 = vcmp.eq.s32.totalorder %v146, 2
    %v152 = vxor.u32 %v143, 2147483648
    %v153 = vsel %vm151, %v152, %v144
    %v154 = vsel %vm147, %v150, %v153
    %v155 = vsel %vm145, nan, %v154
    %v156 = vand.u32 2147483647, %v52
    %vm157 = vcmp.le.f32.partialorder %v156, 0.7853982
    %vm158 = vcmp.lt.s32.totalorder %v52, 0
    %v159 = vand.u32 %v52, 2139095040
    %v160 = vshrl.u32 %v159, 23
    %v161 = vsub.s32 %v160, 127
    %v162 = vand.u32 2147483647, %v52
    %v163 = vand.u32 %v162, 8388607
    %v164 = vor.u32 %v163, 8388608
    %v165 = vsub.s32 0, %v164
    %v166 = vadd.s32 %v161, 1
    %vm167 = vcmp.gt.s32.totalorder %v166, 0
    %v168 = vsel %vm167, %v166, 0
    %v169 = vshrl.u32 %v168, 5
    %v170 = vand.u32 %v168, 31
    %v171 = vsub.s32 32, %v170
    %v172 = vshrl.u32 683565275, %v171
    %v173 = vshll.u32 683565275, %v170
    %v174 = vshrl.u32 2475754826, %v171
    %v175 = vor.u32 %v173, %v174
    %v176 = vshll.u32 2475754826, %v170
    %v177 = vshrl.u32 2131351028, %v171
    %v178 = vor.u32 %v176, %v177
    %v179 = vshll.u32 2131351028, %v170
    %v180 = vshrl.u32 2102212464, %v171
    %v181 = vor.u32 %v179, %v180
    %v182 = vshll.u32 2102212464, %v170
    %v183 = vshrl.u32 920167782, %v171
    %v184 = vor.u32 %v182, %v183
    %v185 = vshll.u32 920167782, %v170
    %v186 = vshrl.u32 1326507024, %v171
    %v187 = vor.u32 %v185, %v186
    %vm188 = vcmp.lt.s32.totalorder %v169, 1
    %vm189 = vcmp.lt.s32.totalorder %v169, 2
    %vm190 = vcmp.lt.s32.totalorder %v169, 3
    %vm191 = vcmp.lt.s32.totalorder %v169, 4
    %v192 = vsel %vm188, %v172, %v175
    %v193 = vsel %vm191, %v181, 2102212464
    %v194 = vsel %vm190, %v178, %v193
    %v195 = vsel %vm189, %v192, %v194
    %v196 = vsel %vm188, %v175, %v178
    %v197 = vsel %vm191, %v184, 920167782
    %v198 = vsel %vm190, %v181, %v197
    %v199 = vsel %vm189, %v196, %v198
    %v200 = vsel %vm188, %v178, %v181
    %v201 = vsel %vm191, %v187, 1326507024
    %v202 = vsel %vm190, %v184, %v201
    %v203 = vsel %vm189, %v200, %v202
    %v204 = vshll.u32 %v164, 8
    %v205 = vmul.u32.u64.compose %v204, %v203
    %v206 = vextract.low.u32 %v205
    %v207 = vextract.high.u32 %v205
    %v208 = vmul.u32.u64.compose %v204, %v199
    %v209 = vextract.low.u32 %v208
    %v210 = vextract.high.u32 %v208
    %v211 = vmul.u32 %v204, %v195
    %v212 = vadd.s32 %v207, %v209
    %vm213 = vc.u32 %v207, %v209
    %v214 = vadd.s32 %v210, 1
    %v215 = vsel %vm213, %v214, %v210
    %v216 = vadd.s32 %v211, %v215
    %v217 = vadd.s32 %v216, 536870912
    %v218 = vshrl.u32 %v217, 30
    %v219 = vshll.u32 %v218, 30
    %v220 = vsub.s32 %v216, %v219
    %vm221 = vcmp.lt.s32.totalorder %v220, 0
    %v222 = vsub.s32 0, %v220
    %v223 = vsel %vm221, %v222, %v220
    %v224 = vclz %v223
    %v225 = vsub.s32 %v224, 2
    %vm226 = vcmp.gt.s32.totalorder 0, %v225
    %v227 = vsel %vm226, 0, %v225
    %v228 = vsub.s32 32, %v227
    %v229 = vshll.u32 %v220, %v227
    %v230 = vshrl.u32 %v212, %v228
    %v231 = vor.u32 %v229, %v230
    %v232 = vsub.s32 4294967266, %v227
    %v233 = vadd.s32 %v232, 127
    %v234 = vshll.u32 %v233, 23
    %v235 = vor.u32 4788187, %v234
    %v236 = vand.u32 2147483647, %v235
    %v238 = vcvt.s32.f32 %v231
    %v239 = vmul.f32 %v238, %v236
    %v240 = vxor.u32 %v239, 2147483648
    %v241 = vsel %vm158, %v240, %v239
    %v242 = vsub.s32 4, %v218
    %v243 = vsel %vm158, %v242, %v218
    %v244 = vsel %vm157, %v52, %v241
    %v245 = vsel %vm157, 0, %v243
    %v246 = vcosq.f32.pop %v244
    %v247 = vsinq.f32.pop %v244
    %vm248 = vweird.f32 %v52
    %v249 = vand.u32 %v245, 3
    %vm250 = vcmp.lt.s32.totalorder %v249, 2
    %vm251 = vcmp.eq.s32.totalorder %v249, 0
    %v252 = vxor.u32 %v247, 2147483648
    %v253 = vsel %vm251, %v246, %v252
    %vm254 = vcmp.eq.s32.totalorder %v249, 2
    %v255 = vxor.u32 %v246, 2147483648
    %v256 = vsel %vm254, %v255, %v247
    %v257 = vsel %vm250, %v253, %v256
    %v258 = vsel %vm248, nan, %v257
    %v259 = vand.u32 2147483647, %v51
    %vm260 = vcmp.le.f32.partialorder %v259, 0.7853982
    %vm261 = vcmp.lt.s32.totalorder %v51, 0
    %v262 = vand.u32 %v51, 2139095040
    %v263 = vshrl.u32 %v262, 23
    %v264 = vsub.s32 %v263, 127
    %v265 = vand.u32 2147483647, %v51
    %v266 = vand.u32 %v265, 8388607
    %v267 = vor.u32 %v266, 8388608
    %v268 = vsub.s32 0, %v267
    %v269 = vadd.s32 %v264, 1
    %vm270 = vcmp.gt.s32.totalorder %v269, 0
    %v271 = vsel %vm270, %v269, 0
    %v272 = vshrl.u32 %v271, 5
    %v273 = vand.u32 %v271, 31
    %v274 = vsub.s32 32, %v273
    %v275 = vshrl.u32 683565275, %v274
    %v276 = vshll.u32 683565275, %v273
    %v277 = vshrl.u32 2475754826, %v274
    %v278 = vor.u32 %v276, %v277
    %v279 = vshll.u32 2475754826, %v273
    %v280 = vshrl.u32 2131351028, %v274
    %v281 = vor.u32 %v279, %v280
    %v282 = vshll.u32 2131351028, %v273
    %v283 = vshrl.u32 2102212464, %v274
    %v284 = vor.u32 %v282, %v283
    %v285 = vshll.u32 2102212464, %v273
    %v286 = vshrl.u32 920167782, %v274
    %v287 = vor.u32 %v285, %v286
    %v288 = vshll.u32 920167782, %v273
    %v289 = vshrl.u32 1326507024, %v274
    %v290 = vor.u32 %v288, %v289
    %vm291 = vcmp.lt.s32.totalorder %v272, 1
    %vm292 = vcmp.lt.s32.totalorder %v272, 2
    %vm293 = vcmp.lt.s32.totalorder %v272, 3
    %vm294 = vcmp.lt.s32.totalorder %v272, 4
    %v295 = vsel %vm291, %v275, %v278
    %v296 = vsel %vm294, %v284, 2102212464
    %v297 = vsel %vm293, %v281, %v296
    %v298 = vsel %vm292, %v295, %v297
    %v299 = vsel %vm291, %v278, %v281
    %v300 = vsel %vm294, %v287, 920167782
    %v301 = vsel %vm293, %v284, %v300
    %v302 = vsel %vm292, %v299, %v301
    %v303 = vsel %vm291, %v281, %v284
    %v304 = vsel %vm294, %v290, 1326507024
    %v305 = vsel %vm293, %v287, %v304
    %v306 = vsel %vm292, %v303, %v305
    %v307 = vshll.u32 %v267, 8
    %v308 = vmul.u32.u64.compose %v307, %v306
    %v309 = vextract.low.u32 %v308
    %v310 = vextract.high.u32 %v308
    %v311 = vmul.u32.u64.compose %v307, %v302
    %v312 = vextract.low.u32 %v311
    %v313 = vextract.high.u32 %v311
    %v314 = vmul.u32 %v307, %v298
    %v315 = vadd.s32 %v310, %v312
    %vm316 = vc.u32 %v310, %v312
    %v317 = vadd.s32 %v313, 1
    %v318 = vsel %vm316, %v317, %v313
    %v319 = vadd.s32 %v314, %v318
    %v320 = vadd.s32 %v319, 536870912
    %v321 = vshrl.u32 %v320, 30
    %v322 = vshll.u32 %v321, 30
    %v323 = vsub.s32 %v319, %v322
    %vm324 = vcmp.lt.s32.totalorder %v323, 0
    %v325 = vsub.s32 0, %v323
    %v326 = vsel %vm324, %v325, %v323
    %v327 = vclz %v326
    %v328 = vsub.s32 %v327, 2
    %vm329 = vcmp.gt.s32.totalorder 0, %v328
    %v330 = vsel %vm329, 0, %v328
    %v331 = vsub.s32 32, %v330
    %v332 = vshll.u32 %v323, %v330
    %v333 = vshrl.u32 %v315, %v331
    %v334 = vor.u32 %v332, %v333
    %v335 = vsub.s32 4294967266, %v330
    %v336 = vadd.s32 %v335, 127
    %v337 = vshll.u32 %v336, 23
    %v338 = vor.u32 4788187, %v337
    %v339 = vand.u32 2147483647, %v338
    %v341 = vcvt.s32.f32 %v334
    %v342 = vmul.f32 %v341, %v339
    %v343 = vxor.u32 %v342, 2147483648
    %v344 = vsel %vm261, %v343, %v342
    %v345 = vsub.s32 4, %v321
    %v346 = vsel %vm261, %v345, %v321
    %v347 = vsel %vm260, %v51, %v344
    %v348 = vsel %vm260, 0, %v346
    %v349 = vcosq.f32.pop %v347
    %v350 = vsinq.f32.pop %v347
    %vm351 = vweird.f32 %v51
    %v352 = vadd.s32 %v348, 3
    %v353 = vand.u32 %v352, 3
    %vm354 = vcmp.lt.s32.totalorder %v353, 2
    %vm355 = vcmp.eq.s32.totalorder %v353, 0
    %v356 = vxor.u32 %v350, 2147483648
    %v357 = vsel %vm355, %v349, %v356
    %vm358 = vcmp.eq.s32.totalorder %v353, 2
    %v359 = vxor.u32 %v349, 2147483648
    %v360 = vsel %vm358, %v359, %v350
    %v361 = vsel %vm354, %v357, %v360
    %v362 = vsel %vm351, nan, %v361
    %v363 = vand.u32 2147483647, %v52
    %vm364 = vcmp.le.f32.partialorder %v363, 0.7853982
    %vm365 = vcmp.lt.s32.totalorder %v52, 0
    %v366 = vand.u32 %v52, 2139095040
    %v367 = vshrl.u32 %v366, 23
    %v368 = vsub.s32 %v367, 127
    %v369 = vand.u32 2147483647, %v52
    %v370 = vand.u32 %v369, 8388607
    %v371 = vor.u32 %v370, 8388608
    %v372 = vsub.s32 0, %v371
    %v373 = vadd.s32 %v368, 1
    %vm374 = vcmp.gt.s32.totalorder %v373, 0
    %v375 = vsel %vm374, %v373, 0
    %v376 = vshrl.u32 %v375, 5
    %v377 = vand.u32 %v375, 31
    %v378 = vsub.s32 32, %v377
    %v379 = vshrl.u32 683565275, %v378
    %v380 = vshll.u32 683565275, %v377
    %v381 = vshrl.u32 2475754826, %v378
    %v382 = vor.u32 %v380, %v381
    %v383 = vshll.u32 2475754826, %v377
    %v384 = vshrl.u32 2131351028, %v378
    %v385 = vor.u32 %v383, %v384
    %v386 = vshll.u32 2131351028, %v377
    %v387 = vshrl.u32 2102212464, %v378
    %v388 = vor.u32 %v386, %v387
    %v389 = vshll.u32 2102212464, %v377
    %v390 = vshrl.u32 920167782, %v378
    %v391 = vor.u32 %v389, %v390
    %v392 = vshll.u32 920167782, %v377
    %v393 = vshrl.u32 1326507024, %v378
    %v394 = vor.u32 %v392, %v393
    %vm395 = vcmp.lt.s32.totalorder %v376, 1
    %vm396 = vcmp.lt.s32.totalorder %v376, 2
    %vm397 = vcmp.lt.s32.totalorder %v376, 3
    %vm398 = vcmp.lt.s32.totalorder %v376, 4
    %v399 = vsel %vm395, %v379, %v382
    %v400 = vsel %vm398, %v388, 2102212464
    %v401 = vsel %vm397, %v385, %v400
    %v402 = vsel %vm396, %v399, %v401
    %v403 = vsel %vm395, %v382, %v385
    %v404 = vsel %vm398, %v391, 920167782
    %v405 = vsel %vm397, %v388, %v404
    %v406 = vsel %vm396, %v403, %v405
    %v407 = vsel %vm395, %v385, %v388
    %v408 = vsel %vm398, %v394, 1326507024
    %v409 = vsel %vm397, %v391, %v408
    %v410 = vsel %vm396, %v407, %v409
    %v411 = vshll.u32 %v371, 8
    %v412 = vmul.u32.u64.compose %v411, %v410
    %v413 = vextract.low.u32 %v412
    %v414 = vextract.high.u32 %v412
    %v415 = vmul.u32.u64.compose %v411, %v406
    %v416 = vextract.low.u32 %v415
    %v417 = vextract.high.u32 %v415
    %v418 = vmul.u32 %v411, %v402
    %v419 = vadd.s32 %v414, %v416
    %vm420 = vc.u32 %v414, %v416
    %v421 = vadd.s32 %v417, 1
    %v422 = vsel %vm420, %v421, %v417
    %v423 = vadd.s32 %v418, %v422
    %v424 = vadd.s32 %v423, 536870912
    %v425 = vshrl.u32 %v424, 30
    %v426 = vshll.u32 %v425, 30
    %v427 = vsub.s32 %v423, %v426
    %vm428 = vcmp.lt.s32.totalorder %v427, 0
    %v429 = vsub.s32 0, %v427
    %v430 = vsel %vm428, %v429, %v427
    %v431 = vclz %v430
    %v432 = vsub.s32 %v431, 2
    %vm433 = vcmp.gt.s32.totalorder 0, %v432
    %v434 = vsel %vm433, 0, %v432
    %v435 = vsub.s32 32, %v434
    %v436 = vshll.u32 %v427, %v434
    %v437 = vshrl.u32 %v419, %v435
    %v438 = vor.u32 %v436, %v437
    %v439 = vsub.s32 4294967266, %v434
    %v440 = vadd.s32 %v439, 127
    %v441 = vshll.u32 %v440, 23
    %v442 = vor.u32 4788187, %v441
    %v443 = vand.u32 2147483647, %v442
    %v445 = vcvt.s32.f32 %v438
    %v446 = vmul.f32 %v445, %v443
    %v447 = vxor.u32 %v446, 2147483648
    %v448 = vsel %vm365, %v447, %v446
    %v449 = vsub.s32 4, %v425
    %v450 = vsel %vm365, %v449, %v425
    %v451 = vsel %vm364, %v52, %v448
    %v452 = vsel %vm364, 0, %v450
    %v453 = vcosq.f32.pop %v451
    %v454 = vsinq.f32.pop %v451
    %vm455 = vweird.f32 %v52
    %v456 = vadd.s32 %v452, 3
    %v457 = vand.u32 %v456, 3
    %vm458 = vcmp.lt.s32.totalorder %v457, 2
    %vm459 = vcmp.eq.s32.totalorder %v457, 0
    %v460 = vxor.u32 %v454, 2147483648
    %v461 = vsel %vm459, %v453, %v460
    %vm462 = vcmp.eq.s32.totalorder %v457, 2
    %v463 = vxor.u32 %v453, 2147483648
    %v464 = vsel %vm462, %v463, %v454
    %v465 = vsel %vm458, %v461, %v464
    %v466 = vsel %vm455, nan, %v465
    %467 = vrot.lane.b32.xlu0 %v155, 64
    %v468 = vpop.permute.xlu0 %467
    %469 = vrot.lane.b32.xlu0 %v258, 64
    %v470 = vpop.permute.xlu0 %469
    %471 = vrot.lane.b32.xlu0 %v362, 64
    %v472 = vpop.permute.xlu0 %471
    %473 = vrot.lane.b32.xlu0 %v466, 64
    %v474 = vpop.permute.xlu0 %473
    %v475 = vsel %vm18, %v155, %v468
    %v476 = vsel %vm18, %v258, %v470
    %477 = vst [vmem:[#allocation2] sm:$0xff] %v475
    %478 = vst [vmem:[#allocation2 + $0x8] sm:$0xff] %v476
    %v479 = vsel %vm18, %v468, %v155
    %v480 = vsel %vm18, %v470, %v258
    %481 = vst [vmem:[#allocation2 + $0x10] sm:$0xff] %v479
    %482 = vst [vmem:[#allocation2 + $0x18] sm:$0xff] %v480
    %v483 = vsel %vm18, %v362, %v472
    %v484 = vsel %vm18, %v466, %v474
    %485 = vst [vmem:[#allocation4] sm:$0xff] %v483
    %486 = vst [vmem:[#allocation4 + $0x8] sm:$0xff] %v484
    %v487 = vsel %vm18, %v472, %v362
    %v488 = vsel %vm18, %v474, %v466
    %489 = vst [vmem:[#allocation4 + $0x10] sm:$0xff] %v487
    %490 = vst [vmem:[#allocation4 + $0x18] sm:$0xff] %v488
    // Predicated region
    $region10: #{tpu_custom_call.1} parent=1 // pred_check
      _
    $region11: #{tpu_custom_call.1} parent=1 // pred_check_branch
      %492 = sbr.rel (0) target = $region13
    $region12: #{tpu_custom_call.1} parent=1 // pred_region
      %s494 = ssub.s32 512, 512
      %495 = vsyncadd [#allocation3], %s494
      %s496 = sshll.u32 [#allocation2], 4
      %s497 = int_to_ptr.vmem [resolvable:$true] %s496
      %502 = dma.vmem_to_hbm [thread:$0]  %s497, 512, %s2, [#allocation3], 128, 128, 8
    $region13: #{tpu_custom_call.1} parent=1 // pred_fallthru
      _
    // Predicated region
    $region14: #{tpu_custom_call.1} parent=1 // pred_check
      _
    $region15: #{tpu_custom_call.1} parent=1 // pred_check_branch
      %504 = sbr.rel (0) target = $region17
    $region16: #{tpu_custom_call.1} parent=1 // pred_region
      %s506 = ssub.s32 512, 512
      %507 = vsyncadd [#allocation5], %s506
      %s508 = sshll.u32 [#allocation4], 4
      %s509 = int_to_ptr.vmem [resolvable:$true] %s508
      %514 = dma.vmem_to_hbm [thread:$0]  %s509, 512, %s3, [#allocation5], 128, 128, 8
    $region17: #{tpu_custom_call.1} parent=1 // pred_fallthru
      _
    // Predicated region
    $region18: #{tpu_custom_call.1} parent=1 // pred_check
      _
    $region19: #{tpu_custom_call.1} parent=1 // pred_check_branch
      %516 = sbr.rel (0) target = $region21
    $region20: #{tpu_custom_call.1} parent=1 // pred_region
      %517 = dma.done [#allocation3], 512
    $region21: #{tpu_custom_call.1} parent=1 // pred_fallthru
      _
    // Predicated region
    $region22: #{tpu_custom_call.1} parent=1 // pred_check
      _
    $region23: #{tpu_custom_call.1} parent=1 // pred_check_branch
      %519 = sbr.rel (0) target = $region25
    $region24: #{tpu_custom_call.1} parent=1 // pred_region
      %520 = dma.done [#allocation5], 512
    $region25: #{tpu_custom_call.1} parent=1 // pred_fallthru
      _
    %521 = vsyncpa [#allocation3], 1
    %522 = vsyncpa [#allocation5], 1

</llo_original>
